<compile_context>
chip_gen: v5e
topology: v5e:2x2
jax: 0.10.0
libtpu: 0.0.40
codegen_flags: <defaults>
</compile_context>

<pallas_src>
import math
from functools import partial

import jax
import jax.numpy as jnp
from jax import lax
from jax.experimental import pallas as pl
from jax.experimental.pallas import tpu as pltpu

_SQRT_HALF = 1.0 / math.sqrt(2.0)


def _gelu_exact(x):
    # torch nn.GELU() default (erf-based, not tanh approximation), f32 math.
    return 0.5 * x * (1.0 + lax.erf(x * _SQRT_HALF))


def _round_up(x, m):
    return (x + m - 1) // m * m


def _pad2(a, rows, cols):
    return jnp.pad(a, ((0, rows - a.shape[0]), (0, cols - a.shape[1])))


def _choose_tile(n, candidates):
    """Tile from `candidates` minimizing padding waste (ties -> larger tile)."""
    best_key, best = None, None
    for t in candidates:
        key = (_round_up(n, t) - n, -t)
        if best_key is None or key < best_key:
            best_key, best = key, t
    return best


def _spec(shape, index_map, *, buffers=None):
    """BlockSpec helper; buffers=1 -> single-buffer constant-index operands."""
    if buffers is not None:
        try:
            return pl.BlockSpec(shape, index_map,
                                pipeline_mode=pl.Buffered(buffers))
        except Exception:  # older jax without pipeline_mode: fall back
            pass
    return pl.BlockSpec(shape, index_map)


def _vmem_capacity_bytes():
    try:
        return int(pltpu.get_tpu_info().vmem_capacity_bytes)
    except Exception:
        return 64 * 1024 * 1024  # conservative (v7x-sized) fallback


# ----------------------------- kernel A ------------------------------------
def mlp_norm_kernel(x_ref, w1_ref, b1_ref, w2_ref, b2_ref, w3_ref, b3_ref,
                    xproj_ref, xn_ref):
    """Batch-tiled MLP + F.normalize(x).  Grid = (batch_tiles,)."""
    x = x_ref[...]                                           # (bm, D) f32
    xb = x.astype(jnp.bfloat16)

    h = jnp.dot(xb, w1_ref[...],
                preferred_element_type=jnp.float32) + b1_ref[...]
    h = _gelu_exact(h)
    h = jnp.dot(h.astype(jnp.bfloat16), w2_ref[...],
                preferred_element_type=jnp.float32) + b2_ref[...]
    h = _gelu_exact(h)
    xproj_ref[...] = jnp.dot(h.astype(jnp.bfloat16), w3_ref[...],
                             preferred_element_type=jnp.float32) + b3_ref[...]

    # F.normalize(x, p=2, dim=-1): x / max(||x||, 1e-12) == x*rsqrt(max(x.x, 1e-24))
    inv_l2 = lax.rsqrt(
        jnp.maximum(jnp.sum(x * x, axis=-1, keepdims=True), 1e-24))
    xn_ref[...] = (x * inv_l2).astype(jnp.bfloat16)


# ----------------------------- kernel B ------------------------------------
def proto_logits_kernel(xn_ref, w_ref, logits_ref):
    """Fused weight-norm / prototype logits.  Grid = (batch_tiles, class_tiles).

    Row inverse L2 norms are pre-folded into w on the host, so this is a pure
    (bm, D) bf16 @ (D, tn) bf16 -> (bm, tn) f32 MXU matmul.
    """
    logits_ref[...] = jnp.dot(xn_ref[...], w_ref[...],
                              preferred_element_type=jnp.float32)


def init_dino_head4_params(key, in_dim, out_dim, hidden_dim, bottleneck_dim,
                           len_seen_classes):
    """Synthetic params in torch layouts ((out, in) weights, 1-D biases)."""
    # TODO(synk): torch uses trunc_normal_(std=0.02); plain normal used here.
    ks = jax.random.split(key, 6)
    std = 0.02
    w1 = jax.random.normal(ks[0], (hidden_dim, in_dim), jnp.float32) * std
    b1 = jnp.zeros((hidden_dim,), jnp.float32)
    w2 = jax.random.normal(ks[1], (hidden_dim, hidden_dim), jnp.float32) * std
    b2 = jnp.zeros((hidden_dim,), jnp.float32)
    w3 = jax.random.normal(ks[2], (bottleneck_dim, hidden_dim), jnp.float32) * std
    b3 = jnp.zeros((bottleneck_dim,), jnp.float32)
    w_last_v = jax.random.normal(ks[3], (out_dim, in_dim), jnp.float32)
    local_protos = jax.random.normal(ks[4], (out_dim * 4, in_dim), jnp.float32)
    global_protos = jax.random.normal(ks[5], (out_dim * 4, in_dim), jnp.float32)
    # __init__ copies last-layer v rows into the first len_seen prototypes.
    local_protos = local_protos.at[:len_seen_classes].set(
        w_last_v[:len_seen_classes])
    return dict(w1=w1, b1=b1, w2=w2, b2=b2, w3=w3, b3=b3,
                w_last_v=w_last_v,
                local_prototypes=local_protos,
                global_prototypes=global_protos)


@partial(jax.jit, static_argnums=(2,))
def dino_head4_forward(x, params, len_seen_classes):
    B, in_dim = x.shape
    hidden = params["w1"].shape[0]
    bottleneck = params["w3"].shape[0]
    n_proto = params["local_prototypes"].shape[0]            # out_dim * 4

    vmem = _vmem_capacity_bytes()
    vmem_limit = int(vmem * 3 // 4)

    D_pad = _round_up(in_dim, 128)
    H_pad = _round_up(hidden, 128)
    Bn_pad = _round_up(bottleneck, 128)

    # Only the first len_seen_classes rows of the weight-normed last layer are
    # ever consumed downstream -> compute only those.
    o_lab = len_seen_classes
    O_total = o_lab + 2 * n_proto
    tn = _choose_tile(O_total, (2048, 1024, 512, 256, 128))
    O_pad = _round_up(O_total, tn)

    # Batch tiles: bm_b feeds the W-streaming matmul (roofline wants large);
    # bm_a <= 256 bounds the MLP's (bm, H) f32 intermediates.  bm_a divides
    # bm_b so both kernels share one B_pad.
    if B <= 128:
        bm_b = _round_up(max(B, 16), 16)
    else:
        bm_b = _choose_tile(B, (512, 256, 128))
    bm_a = min(bm_b, 256)
    B_pad = _round_up(B, bm_b)

    # ----------------- parameter / input prep (layout plumbing) ------------
    w1 = _pad2(params["w1"].T, D_pad, H_pad).astype(jnp.bfloat16)
    w2 = _pad2(params["w2"].T, H_pad, H_pad).astype(jnp.bfloat16)
    w3 = _pad2(params["w3"].T, H_pad, Bn_pad).astype(jnp.bfloat16)
    b1 = _pad2(params["b1"][None, :].astype(jnp.float32), 1, H_pad)
    b2 = _pad2(params["b2"][None, :].astype(jnp.float32), 1, H_pad)
    b3 = _pad2(params["b3"][None, :].astype(jnp.float32), 1, Bn_pad)

    # Fused prototype matrix: [ last_layer v[:len_seen] ; local ; global ].
    # weight_norm gain g == 1 (original0.data.fill_(1)) so normalized weight
    # is just v / ||v|| row-wise.  Row inverse norms folded in on the host.
    w_lab = params["w_last_v"][:o_lab]
    lp = params["local_prototypes"]
    gp = params["global_prototypes"]
    w_all = jnp.concatenate([w_lab, lp, gp], axis=0)          # (O_total, D) f32
    inv_all = lax.rsqrt(
        jnp.maximum(jnp.sum(w_all * w_all, axis=-1, keepdims=True), 1e-24))
    w_all_t = _pad2((w_all * inv_all).T, D_pad, O_pad).astype(jnp.bfloat16)

    x_pad = _pad2(x.astype(jnp.float32), B_pad, D_pad)

    # ---------------- kernel A: MLP + F.normalize(x) -----------------------
    mlp_flops = 2 * B_pad * (D_pad * H_pad + H_pad * H_pad + H_pad * Bn_pad)
    mlp_bytes = (x_pad.size * 4 + (w1.size + w2.size + w3.size) * 2
                 + (b1.size + b2.size + b3.size) * 4
                 + B_pad * Bn_pad * 4 + B_pad * D_pad * 2)
    x_proj_p, xn = pl.pallas_call(
        mlp_norm_kernel,
        out_shape=(
            jax.ShapeDtypeStruct((B_pad, Bn_pad), jnp.float32),
            jax.ShapeDtypeStruct((B_pad, D_pad), jnp.bfloat16),
        ),
        grid_spec=pltpu.PrefetchScalarGridSpec(
            num_scalar_prefetch=0,
            grid=(B_pad // bm_a,),
            in_specs=[
                pl.BlockSpec((bm_a, D_pad), lambda b: (b, 0)),          # x
                _spec((D_pad, H_pad), lambda b: (0, 0), buffers=1),     # w1^T
                _spec((1, H_pad), lambda b: (0, 0), buffers=1),         # b1
                _spec((H_pad, H_pad), lambda b: (0, 0), buffers=1),     # w2^T
                _spec((1, H_pad), lambda b: (0, 0), buffers=1),         # b2
                _spec((H_pad, Bn_pad), lambda b: (0, 0), buffers=1),    # w3^T
                _spec((1, Bn_pad), lambda b: (0, 0), buffers=1),        # b3
            ],
            out_specs=(
                pl.BlockSpec((bm_a, Bn_pad), lambda b: (b, 0)),         # x_proj
                pl.BlockSpec((bm_a, D_pad), lambda b: (b, 0)),          # xn
            ),
        ),
        compiler_params=pltpu.CompilerParams(
            dimension_semantics=("parallel",),
            vmem_limit_bytes=vmem_limit,
        ),
        cost_estimate=pl.CostEstimate(flops=mlp_flops,
                                      transcendentals=2 * B_pad * H_pad,
                                      bytes_accessed=mlp_bytes),
    )(x_pad, w1, b1, w2, b2, w3, b3)

    # ---------- kernel B: fused weight-norm / prototype logits -------------
    proto_flops = 2 * B_pad * D_pad * O_pad
    proto_bytes = (B_pad * D_pad * 2
                   + (B_pad // bm_b) * D_pad * O_pad * 2
                   + B_pad * O_pad * 4)
    logits_p = pl.pallas_call(
        proto_logits_kernel,
        out_shape=jax.ShapeDtypeStruct((B_pad, O_pad), jnp.float32),
        grid_spec=pltpu.PrefetchScalarGridSpec(
            num_scalar_prefetch=0,
            grid=(B_pad // bm_b, O_pad // tn),
            in_specs=[
                pl.BlockSpec((bm_b, D_pad), lambda b, o: (b, 0)),       # xn
                pl.BlockSpec((D_pad, tn), lambda b, o: (0, o)),         # W tile
            ],
            out_specs=pl.BlockSpec((bm_b, tn), lambda b, o: (b, o)),
        ),
        compiler_params=pltpu.CompilerParams(
            dimension_semantics=("parallel", "parallel"),
            vmem_limit_bytes=vmem_limit,
        ),
        cost_estimate=pl.CostEstimate(flops=proto_flops, transcendentals=0,
                                      bytes_accessed=proto_bytes),
    )(xn, w_all_t)

    x_proj = x_proj_p[:B, :bottleneck]
    logits = logits_p[:B, :O_total]
    lab = logits[:, :o_lab]
    unlab = logits[:, o_lab:o_lab + n_proto]
    glob = logits[:, o_lab + n_proto:O_total]
    return x_proj, (lab, unlab, glob)


def _reference_forward(x, p, len_seen_classes):
    """Pure-JAX f32 reference matching the PyTorch module."""
    def gelu(v):
        return 0.5 * v * (1.0 + lax.erf(v * _SQRT_HALF))
    h = x @ p["w1"].T + p["b1"]
    h = gelu(h)
    h = h @ p["w2"].T + p["b2"]
    h = gelu(h)
    x_proj = h @ p["w3"].T + p["b3"]
    xn = x / jnp.maximum(jnp.linalg.norm(x, axis=-1, keepdims=True), 1e-12)
    wl = p["w_last_v"] / jnp.linalg.norm(p["w_last_v"], axis=-1, keepdims=True)
    lab = (xn @ wl.T)[:, :len_seen_classes]
    lpn = p["local_prototypes"] / jnp.maximum(
        jnp.linalg.norm(p["local_prototypes"], axis=-1, keepdims=True), 1e-12)
    gpn = p["global_prototypes"] / jnp.maximum(
        jnp.linalg.norm(p["global_prototypes"], axis=-1, keepdims=True), 1e-12)
    return x_proj, lab, xn @ lpn.T, xn @ gpn.T


if __name__ == "__main__":
    # Small TPU-friendly shapes consistent with the module's forward.
    B = 8
    in_dim = 32
    hidden_dim = 64
    bottleneck_dim = 32
    out_dim = 16
    len_seen_classes = 8

    key = jax.random.PRNGKey(0)
    k_param, k_x = jax.random.split(key)
    params = init_dino_head4_params(k_param, in_dim, out_dim, hidden_dim,
                                    bottleneck_dim, len_seen_classes)
    x = jax.random.normal(k_x, (B, in_dim), jnp.float32)

    x_proj, (lab, unlab, glob) = dino_head4_forward(x, params, len_seen_classes)
    jax.block_until_ready((x_proj, lab, unlab, glob))

    assert x_proj.shape == (B, bottleneck_dim)
    assert lab.shape == (B, len_seen_classes)
    assert unlab.shape == (B, out_dim * 4)
    assert glob.shape == (B, out_dim * 4)

    # Loose tolerance: kernels use bf16 matmul inputs with f32 accumulation.
    r_proj, r_lab, r_unlab, r_glob = _reference_forward(x, params, len_seen_classes)
    assert bool(jnp.allclose(x_proj, r_proj, rtol=5e-2, atol=3e-2))
    assert bool(jnp.allclose(lab, r_lab, rtol=5e-2, atol=3e-2))
    assert bool(jnp.allclose(unlab, r_unlab, rtol=5e-2, atol=3e-2))
    assert bool(jnp.allclose(glob, r_glob, rtol=5e-2, atol=3e-2))

    print("KERNEL_OK")
</pallas_src>

<mosaic_0001>
module attributes {stable_mosaic.version = 11 : i64} {
  func.func @mlp_norm_kernel(%arg0: i32, %arg1: memref<16x128xf32, #tpu.memory_space<vmem>>, %arg2: memref<128x128xbf16, #tpu.memory_space<vmem>>, %arg3: memref<1x128xf32, #tpu.memory_space<vmem>>, %arg4: memref<128x128xbf16, #tpu.memory_space<vmem>>, %arg5: memref<1x128xf32, #tpu.memory_space<vmem>>, %arg6: memref<128x128xbf16, #tpu.memory_space<vmem>>, %arg7: memref<1x128xf32, #tpu.memory_space<vmem>>, %arg8: memref<16x128xf32, #tpu.memory_space<vmem>>, %arg9: memref<16x128xbf16, #tpu.memory_space<vmem>>) attributes {dimension_semantics = [#tpu.dimension_semantics<parallel>], iteration_bounds = array<i64: 1>, scalar_prefetch = 0 : i64, scratch_operands = 0 : i64, tpu.core_type = #tpu.core_type<tc>, window_params = [{transform_indices = @transform_0, window_bounds = array<i64: 16, 128>}, {pipeline_mode = #tpu.pipeline_mode<synchronous>, transform_indices = @transform_1, window_bounds = array<i64: 128, 128>}, {pipeline_mode = #tpu.pipeline_mode<synchronous>, transform_indices = @transform_2, window_bounds = array<i64: 1, 128>}, {pipeline_mode = #tpu.pipeline_mode<synchronous>, transform_indices = @transform_3, window_bounds = array<i64: 128, 128>}, {pipeline_mode = #tpu.pipeline_mode<synchronous>, transform_indices = @transform_4, window_bounds = array<i64: 1, 128>}, {pipeline_mode = #tpu.pipeline_mode<synchronous>, transform_indices = @transform_5, window_bounds = array<i64: 128, 128>}, {pipeline_mode = #tpu.pipeline_mode<synchronous>, transform_indices = @transform_6, window_bounds = array<i64: 1, 128>}, {transform_indices = @transform_7, window_bounds = array<i64: 16, 128>}, {transform_indices = @transform_8, window_bounds = array<i64: 16, 128>}]} {
    %c0 = arith.constant 0 : index
    %c0_0 = arith.constant 0 : index
    %0 = vector.load %arg1[%c0, %c0_0] : memref<16x128xf32, #tpu.memory_space<vmem>>, vector<16x128xf32>
    %1 = arith.truncf %0 : vector<16x128xf32> to vector<16x128xbf16>
    %c0_1 = arith.constant 0 : index
    %c0_2 = arith.constant 0 : index
    %2 = vector.load %arg2[%c0_1, %c0_2] : memref<128x128xbf16, #tpu.memory_space<vmem>>, vector<128x128xbf16>
    %cst = arith.constant dense<0.000000e+00> : vector<16x128xf32>
    %3 = tpu.matmul %1, %2, %cst {dimension_numbers = #tpu.dot_dimension_numbers<[1], [0], [0], [1], [0, 0, 1, 1], [], []>} : vector<16x128xbf16>, vector<128x128xbf16>, vector<16x128xf32> -> vector<16x128xf32>
    %c0_3 = arith.constant 0 : index
    %c0_4 = arith.constant 0 : index
    %4 = vector.load %arg3[%c0_3, %c0_4] : memref<1x128xf32, #tpu.memory_space<vmem>>, vector<1x128xf32>
    %5 = vector.broadcast %4 : vector<1x128xf32> to vector<16x128xf32>
    %6 = arith.addf %3, %5 : vector<16x128xf32>
    %cst_5 = arith.constant 5.000000e-01 : f32
    %7 = vector.broadcast %cst_5 : f32 to vector<16x128xf32>
    %8 = arith.mulf %7, %6 : vector<16x128xf32>
    %cst_6 = arith.constant 0.707106769 : f32
    %9 = vector.broadcast %cst_6 : f32 to vector<16x128xf32>
    %10 = arith.mulf %6, %9 : vector<16x128xf32>
    %11 = math.erf %10 : vector<16x128xf32>
    %cst_7 = arith.constant 1.000000e+00 : f32
    %12 = vector.broadcast %cst_7 : f32 to vector<16x128xf32>
    %13 = arith.addf %12, %11 : vector<16x128xf32>
    %14 = arith.mulf %8, %13 : vector<16x128xf32>
    %15 = arith.truncf %14 : vector<16x128xf32> to vector<16x128xbf16>
    %c0_8 = arith.constant 0 : index
    %c0_9 = arith.constant 0 : index
    %16 = vector.load %arg4[%c0_8, %c0_9] : memref<128x128xbf16, #tpu.memory_space<vmem>>, vector<128x128xbf16>
    %cst_10 = arith.constant dense<0.000000e+00> : vector<16x128xf32>
    %17 = tpu.matmul %15, %16, %cst_10 {dimension_numbers = #tpu.dot_dimension_numbers<[1], [0], [0], [1], [0, 0, 1, 1], [], []>} : vector<16x128xbf16>, vector<128x128xbf16>, vector<16x128xf32> -> vector<16x128xf32>
    %c0_11 = arith.constant 0 : index
    %c0_12 = arith.constant 0 : index
    %18 = vector.load %arg5[%c0_11, %c0_12] : memref<1x128xf32, #tpu.memory_space<vmem>>, vector<1x128xf32>
    %19 = vector.broadcast %18 : vector<1x128xf32> to vector<16x128xf32>
    %20 = arith.addf %17, %19 : vector<16x128xf32>
    %cst_13 = arith.constant 5.000000e-01 : f32
    %21 = vector.broadcast %cst_13 : f32 to vector<16x128xf32>
    %22 = arith.mulf %21, %20 : vector<16x128xf32>
    %cst_14 = arith.constant 0.707106769 : f32
    %23 = vector.broadcast %cst_14 : f32 to vector<16x128xf32>
    %24 = arith.mulf %20, %23 : vector<16x128xf32>
    %25 = math.erf %24 : vector<16x128xf32>
    %cst_15 = arith.constant 1.000000e+00 : f32
    %26 = vector.broadcast %cst_15 : f32 to vector<16x128xf32>
    %27 = arith.addf %26, %25 : vector<16x128xf32>
    %28 = arith.mulf %22, %27 : vector<16x128xf32>
    %29 = arith.truncf %28 : vector<16x128xf32> to vector<16x128xbf16>
    %c0_16 = arith.constant 0 : index
    %c0_17 = arith.constant 0 : index
    %30 = vector.load %arg6[%c0_16, %c0_17] : memref<128x128xbf16, #tpu.memory_space<vmem>>, vector<128x128xbf16>
    %cst_18 = arith.constant dense<0.000000e+00> : vector<16x128xf32>
    %31 = tpu.matmul %29, %30, %cst_18 {dimension_numbers = #tpu.dot_dimension_numbers<[1], [0], [0], [1], [0, 0, 1, 1], [], []>} : vector<16x128xbf16>, vector<128x128xbf16>, vector<16x128xf32> -> vector<16x128xf32>
    %c0_19 = arith.constant 0 : index
    %c0_20 = arith.constant 0 : index
    %32 = vector.load %arg7[%c0_19, %c0_20] : memref<1x128xf32, #tpu.memory_space<vmem>>, vector<1x128xf32>
    %33 = vector.broadcast %32 : vector<1x128xf32> to vector<16x128xf32>
    %34 = arith.addf %31, %33 : vector<16x128xf32>
    %c0_21 = arith.constant 0 : index
    %c0_22 = arith.constant 0 : index
    %35 = vector.load %arg8[%c0_21, %c0_22] : memref<16x128xf32, #tpu.memory_space<vmem>>, vector<16x128xf32>
    tpu.vector_store %arg8[%c0_21, %c0_22], %34 {strides = array<i32>} : memref<16x128xf32, #tpu.memory_space<vmem>>, vector<16x128xf32>,
    %36 = arith.mulf %0, %0 : vector<16x128xf32>
    %cst_23 = arith.constant dense<0.000000e+00> : vector<16xf32>
    %37 = vector.multi_reduction <add>, %36, %cst_23 [1] : vector<16x128xf32> to vector<16xf32>
    %38 = vector.shape_cast %37 : vector<16xf32> to vector<16x1xf32>
    %cst_24 = arith.constant 1.000000e-24 : f32
    %39 = vector.broadcast %cst_24 : f32 to vector<16x1xf32>
    %40 = arith.maximumf %38, %39 : vector<16x1xf32>
    %41 = math.rsqrt %40 : vector<16x1xf32>
    %42 = vector.broadcast %41 : vector<16x1xf32> to vector<16x128xf32>
    %43 = arith.mulf %0, %42 : vector<16x128xf32>
    %44 = arith.truncf %43 : vector<16x128xf32> to vector<16x128xbf16>
    %c0_25 = arith.constant 0 : index
    %c0_26 = arith.constant 0 : index
    %45 = vector.load %arg9[%c0_25, %c0_26] : memref<16x128xbf16, #tpu.memory_space<vmem>>, vector<16x128xbf16>
    tpu.vector_store %arg9[%c0_25, %c0_26], %44 {strides = array<i32>} : memref<16x128xbf16, #tpu.memory_space<vmem>>, vector<16x128xbf16>,
    return
  }
  func.func @transform_0(%arg0: i32) -> (i32, i32) {
    %c0_i32 = arith.constant 0 : i32
    %c0_i32_0 = arith.constant 0 : i32
    return %arg0, %c0_i32 : i32, i32
  }
  func.func @transform_1(%arg0: i32) -> (i32, i32) {
    %c0_i32 = arith.constant 0 : i32
    %c0_i32_0 = arith.constant 0 : i32
    %c0_i32_1 = arith.constant 0 : i32
    return %c0_i32, %c0_i32_0 : i32, i32
  }
  func.func @transform_2(%arg0: i32) -> (i32, i32) {
    %c0_i32 = arith.constant 0 : i32
    %c0_i32_0 = arith.constant 0 : i32
    %c0_i32_1 = arith.constant 0 : i32
    return %c0_i32, %c0_i32_0 : i32, i32
  }
  func.func @transform_3(%arg0: i32) -> (i32, i32) {
    %c0_i32 = arith.constant 0 : i32
    %c0_i32_0 = arith.constant 0 : i32
    %c0_i32_1 = arith.constant 0 : i32
    return %c0_i32, %c0_i32_0 : i32, i32
  }
  func.func @transform_4(%arg0: i32) -> (i32, i32) {
    %c0_i32 = arith.constant 0 : i32
    %c0_i32_0 = arith.constant 0 : i32
    %c0_i32_1 = arith.constant 0 : i32
    return %c0_i32, %c0_i32_0 : i32, i32
  }
  func.func @transform_5(%arg0: i32) -> (i32, i32) {
    %c0_i32 = arith.constant 0 : i32
    %c0_i32_0 = arith.constant 0 : i32
    %c0_i32_1 = arith.constant 0 : i32
    return %c0_i32, %c0_i32_0 : i32, i32
  }
  func.func @transform_6(%arg0: i32) -> (i32, i32) {
    %c0_i32 = arith.constant 0 : i32
    %c0_i32_0 = arith.constant 0 : i32
    %c0_i32_1 = arith.constant 0 : i32
    return %c0_i32, %c0_i32_0 : i32, i32
  }
  func.func @transform_7(%arg0: i32) -> (i32, i32) {
    %c0_i32 = arith.constant 0 : i32
    %c0_i32_0 = arith.constant 0 : i32
    return %arg0, %c0_i32 : i32, i32
  }
  func.func @transform_8(%arg0: i32) -> (i32, i32) {
    %c0_i32 = arith.constant 0 : i32
    %c0_i32_0 = arith.constant 0 : i32
    return %arg0, %c0_i32 : i32, i32
  }
}

module attributes {stable_mosaic.version = 11 : i64} {
  func.func @proto_logits_kernel(%arg0: i32, %arg1: i32, %arg2: memref<16x128xbf16, #tpu.memory_space<vmem>>, %arg3: memref<128x256xbf16, #tpu.memory_space<vmem>>, %arg4: memref<16x256xf32, #tpu.memory_space<vmem>>) attributes {dimension_semantics = [#tpu.dimension_semantics<parallel>, #tpu.dimension_semantics<parallel>], iteration_bounds = array<i64: 1, 1>, scalar_prefetch = 0 : i64, scratch_operands = 0 : i64, tpu.core_type = #tpu.core_type<tc>, window_params = [{transform_indices = @transform_0, window_bounds = array<i64: 16, 128>}, {transform_indices = @transform_1, window_bounds = array<i64: 128, 256>}, {transform_indices = @transform_2, window_bounds = array<i64: 16, 256>}]} {
    %c0 = arith.constant 0 : index
    %c0_0 = arith.constant 0 : index
    %0 = vector.load %arg2[%c0, %c0_0] : memref<16x128xbf16, #tpu.memory_space<vmem>>, vector<16x128xbf16>
    %c0_1 = arith.constant 0 : index
    %c0_2 = arith.constant 0 : index
    %1 = vector.load %arg3[%c0_1, %c0_2] : memref<128x256xbf16, #tpu.memory_space<vmem>>, vector<128x256xbf16>
    %cst = arith.constant dense<0.000000e+00> : vector<16x256xf32>
    %2 = tpu.matmul %0, %1, %cst {dimension_numbers = #tpu.dot_dimension_numbers<[1], [0], [0], [1], [0, 0, 1, 1], [], []>} : vector<16x128xbf16>, vector<128x256xbf16>, vector<16x256xf32> -> vector<16x256xf32>
    %c0_3 = arith.constant 0 : index
    %c0_4 = arith.constant 0 : index
    %3 = vector.load %arg4[%c0_3, %c0_4] : memref<16x256xf32, #tpu.memory_space<vmem>>, vector<16x256xf32>
    tpu.vector_store %arg4[%c0_3, %c0_4], %2 {strides = array<i32>} : memref<16x256xf32, #tpu.memory_space<vmem>>, vector<16x256xf32>,
    return
  }
  func.func @transform_0(%arg0: i32, %arg1: i32) -> (i32, i32) {
    %c0_i32 = arith.constant 0 : i32
    %c0_i32_0 = arith.constant 0 : i32
    return %arg0, %c0_i32 : i32, i32
  }
  func.func @transform_1(%arg0: i32, %arg1: i32) -> (i32, i32) {
    %c0_i32 = arith.constant 0 : i32
    %c0_i32_0 = arith.constant 0 : i32
    return %c0_i32, %arg1 : i32, i32
  }
  func.func @transform_2(%arg0: i32, %arg1: i32) -> (i32, i32) {
    %c0_i32 = arith.constant 0 : i32
    return %arg0, %arg1 : i32, i32
  }
}

</mosaic_0001>

<llo_original>
// kernel: dino_head4_forward.3
$region0: #{dino_head4_forward.3}
  #allocation0 [shape = 'u32[]', space=smem, size = 0x4, offset = 0x4, fixed_abs, tag = 'smem constant byte address 0x4 - core index']
  #allocation1 [shape = 'u32[72,128]{1,0:T(1,128)}', space=vmem, size = 0x9000, scoped, tag = 'internal scratch']
  %s0 = inlined_call_operand.vmem [shape: bf16[16,128], index: 0, kind: input, shape index: {}]
  %s1 = inlined_call_operand.vmem [shape: bf16[128,256], index: 1, kind: input, shape index: {}]
  %s2 = inlined_call_operand.vmem [shape: f32[16,256], index: 2, kind: output, shape index: {}]
  %s3 = sld [smem:[#allocation0]]
  $region18: #{dino_head4_forward.3} parent=0
    _
  %s5 = ssub.s32 1, %s3
  %s6 = scalar_select 0, %s5, %s3
  // Predicated region
  $region2: #{dino_head4_forward.3} parent=0 // pred_check
    _
  $region3: #{dino_head4_forward.3} parent=0 // pred_check_branch
    %8 = sbr.rel (0) target = $region5
  $region4: #{dino_head4_forward.3} parent=0 // pred_region
    _
  $region5: #{dino_head4_forward.3} parent=0 // pred_fallthru
    _
  // Predicated region
  $region6: #{dino_head4_forward.3} parent=0 // pred_check
    _
  $region7: #{dino_head4_forward.3} parent=0 // pred_check_branch
    %10 = sbr.rel (0) target = $region9
  $region8: #{dino_head4_forward.3} parent=0 // pred_region
    _
  $region9: #{dino_head4_forward.3} parent=0 // pred_fallthru
    _
  %v11 = vld [vmem:[%s0] sm:$0xf]
  %v12 = vld [vmem:[%s0 + $0x4] sm:$0xf]
  %v13 = vld [vmem:[%s1] sm:$0xff]
  %v14 = vld [vmem:[%s1 + $0x8] sm:$0xff]
  %v15 = vld [vmem:[%s1 + $0x10] sm:$0xff]
  %v16 = vld [vmem:[%s1 + $0x18] sm:$0xff]
  %v17 = vld [vmem:[%s1 + $0x20] sm:$0xff]
  %v18 = vld [vmem:[%s1 + $0x28] sm:$0xff]
  %v19 = vld [vmem:[%s1 + $0x30] sm:$0xff]
  %v20 = vld [vmem:[%s1 + $0x38] sm:$0xff]
  %v21 = vld [vmem:[%s1 + $0x40] sm:$0xff]
  %v22 = vld [vmem:[%s1 + $0x48] sm:$0xff]
  %v23 = vld [vmem:[%s1 + $0x50] sm:$0xff]
  %v24 = vld [vmem:[%s1 + $0x58] sm:$0xff]
  %v25 = vld [vmem:[%s1 + $0x60] sm:$0xff]
  %v26 = vld [vmem:[%s1 + $0x68] sm:$0xff]
  %v27 = vld [vmem:[%s1 + $0x70] sm:$0xff]
  %v28 = vld [vmem:[%s1 + $0x78] sm:$0xff]
  %v31 = vunpack.c.l.b16 %v11
  %v32 = vunpack.c.l.b16 %v12
  %v33 = vpack.c.b16 %v32, %v31
  %v51 = vunpack.c.l.b16 %v13
  %v52 = vunpack.c.h.b16 %v13
  %v53 = vunpack.c.l.b16 %v14
  %v54 = vunpack.c.h.b16 %v14
  %v55 = vunpack.c.l.b16 %v15
  %v56 = vunpack.c.h.b16 %v15
  %v57 = vunpack.c.l.b16 %v16
  %v58 = vunpack.c.h.b16 %v16
  %v59 = vunpack.c.l.b16 %v17
  %v60 = vunpack.c.h.b16 %v17
  %v61 = vunpack.c.l.b16 %v18
  %v62 = vunpack.c.h.b16 %v18
  %v63 = vunpack.c.l.b16 %v19
  %v64 = vunpack.c.h.b16 %v19
  %v65 = vunpack.c.l.b16 %v20
  %v66 = vunpack.c.h.b16 %v20
  %v67 = vunpack.c.l.b16 %v21
  %v68 = vunpack.c.h.b16 %v21
  %v69 = vunpack.c.l.b16 %v22
  %v70 = vunpack.c.h.b16 %v22
  %v71 = vunpack.c.l.b16 %v23
  %v72 = vunpack.c.h.b16 %v23
  %v73 = vunpack.c.l.b16 %v24
  %v74 = vunpack.c.h.b16 %v24
  %v75 = vunpack.c.l.b16 %v25
  %v76 = vunpack.c.h.b16 %v25
  %v77 = vunpack.c.l.b16 %v26
  %v78 = vunpack.c.h.b16 %v26
  %v79 = vunpack.c.l.b16 %v27
  %v80 = vunpack.c.h.b16 %v27
  %v81 = vunpack.c.l.b16 %v28
  %v82 = vunpack.c.h.b16 %v28
  %v83 = vpack.c.b16 %v53, %v51
  %v84 = vpack.c.b16 %v54, %v52
  %v85 = vpack.c.b16 %v57, %v55
  %v86 = vpack.c.b16 %v58, %v56
  %v87 = vpack.c.b16 %v61, %v59
  %v88 = vpack.c.b16 %v62, %v60
  %v89 = vpack.c.b16 %v65, %v63
  %v90 = vpack.c.b16 %v66, %v64
  %v91 = vpack.c.b16 %v69, %v67
  %v92 = vpack.c.b16 %v70, %v68
  %v93 = vpack.c.b16 %v73, %v71
  %v94 = vpack.c.b16 %v74, %v72
  %v95 = vpack.c.b16 %v77, %v75
  %v96 = vpack.c.b16 %v78, %v76
  %v97 = vpack.c.b16 %v81, %v79
  %v98 = vpack.c.b16 %v82, %v80
  %115 = vmatpush.bf16.msra.mxu0 %v97
  %116 = vmatpush.bf16.msra.mxu0 %v95
  %117 = vmatpush.bf16.msra.mxu0 %v93
  %118 = vmatpush.bf16.msra.mxu0 %v91
  %119 = vmatpush.bf16.msra.mxu0 %v89
  %120 = vmatpush.bf16.msra.mxu0 %v87
  %121 = vmatpush.bf16.msra.mxu0 %v85
  %122 = vmatpush.bf16.msra.mxu0 %v83
  %123 = vmatmul.bf16.gmra.mxu0 %v33
  %v124 = vpop.f32.mrf.mxu0
  %v125 = vadd.f32 0.0, %v124
  %v126 = vpop.f32.mrf.mxu0
  %v127 = vadd.f32 0.0, %v126
  %128 = vdwg.mxu0
  %129 = vmatpush.bf16.msra.mxu0 %v98
  %130 = vmatpush.bf16.msra.mxu0 %v96
  %131 = vmatpush.bf16.msra.mxu0 %v94
  %132 = vmatpush.bf16.msra.mxu0 %v92
  %133 = vmatpush.bf16.msra.mxu0 %v90
  %134 = vmatpush.bf16.msra.mxu0 %v88
  %135 = vmatpush.bf16.msra.mxu0 %v86
  %136 = vmatpush.bf16.msra.mxu0 %v84
  %137 = vmatmul.bf16.gmra.mxu0 %v33
  %v138 = vpop.f32.mrf.mxu0
  %v139 = vadd.f32 0.0, %v138
  %v140 = vpop.f32.mrf.mxu0
  %v141 = vadd.f32 0.0, %v140
  %142 = vdwg.mxu0
  %143 = vst [vmem:[%s2] sm:$0xff] %v125
  %144 = vst [vmem:[%s2 + $0x8] sm:$0xff] %v139
  %145 = vst [vmem:[%s2 + $0x10] sm:$0xff] %v127
  %146 = vst [vmem:[%s2 + $0x18] sm:$0xff] %v141
  // Predicated region
  $region10: #{dino_head4_forward.3} parent=0 // pred_check
    _
  $region11: #{dino_head4_forward.3} parent=0 // pred_check_branch
    %148 = sbr.rel (0) target = $region13
  $region12: #{dino_head4_forward.3} parent=0 // pred_region
    _
  $region13: #{dino_head4_forward.3} parent=0 // pred_fallthru
    _
  // Predicated region
  $region14: #{dino_head4_forward.3} parent=0 // pred_check
    _
  $region15: #{dino_head4_forward.3} parent=0 // pred_check_branch
    %150 = sbr.rel (0) target = $region17
  $region16: #{dino_head4_forward.3} parent=0 // pred_region
    _
  $region17: #{dino_head4_forward.3} parent=0 // pred_fallthru
    _

// kernel: dino_head4_forward.2
$region0: #{dino_head4_forward.2}
  #allocation0 [shape = 'u32[]', space=smem, size = 0x4, offset = 0x4, fixed_abs, tag = 'smem constant byte address 0x4 - core index']
  #allocation1 [shape = 'u32[72,128]{1,0:T(1,128)}', space=vmem, size = 0x9000, scoped, tag = 'internal scratch']
  %s0 = inlined_call_operand.vmem [shape: f32[16,128], index: 0, kind: input, shape index: {}]
  %s1 = inlined_call_operand.vmem [shape: bf16[128,128], index: 1, kind: input, shape index: {}]
  %s2 = inlined_call_operand.vmem [shape: f32[1,128], index: 2, kind: input, shape index: {}]
  %s3 = inlined_call_operand.vmem [shape: bf16[128,128], index: 3, kind: input, shape index: {}]
  %s4 = inlined_call_operand.vmem [shape: f32[1,128], index: 4, kind: input, shape index: {}]
  %s5 = inlined_call_operand.vmem [shape: bf16[128,128], index: 5, kind: input, shape index: {}]
  %s6 = inlined_call_operand.vmem [shape: f32[1,128], index: 6, kind: input, shape index: {}]
  %s7 = inlined_call_operand.vmem [shape: f32[16,128], index: 7, kind: output, shape index: {0}]
  %s8 = inlined_call_operand.vmem [shape: bf16[16,128], index: 8, kind: output, shape index: {1}]
  %9 = xla_tuple %s7, %s8
  %s10 = sld [smem:[#allocation0]]
  $region46: #{dino_head4_forward.2} parent=0
    _
  %s12 = ssub.s32 1, %s10
  %s13 = scalar_select 0, %s12, %s10
  // Predicated region
  $region2: #{dino_head4_forward.2} parent=0 // pred_check
    _
  $region3: #{dino_head4_forward.2} parent=0 // pred_check_branch
    %15 = sbr.rel (0) target = $region5
  $region4: #{dino_head4_forward.2} parent=0 // pred_region
    _
  $region5: #{dino_head4_forward.2} parent=0 // pred_fallthru
    _
  // Predicated region
  $region6: #{dino_head4_forward.2} parent=0 // pred_check
    _
  $region7: #{dino_head4_forward.2} parent=0 // pred_check_branch
    %17 = sbr.rel (0) target = $region9
  $region8: #{dino_head4_forward.2} parent=0 // pred_region
    _
  $region9: #{dino_head4_forward.2} parent=0 // pred_fallthru
    _
  // Predicated region
  $region10: #{dino_head4_forward.2} parent=0 // pred_check
    _
  $region11: #{dino_head4_forward.2} parent=0 // pred_check_branch
    %19 = sbr.rel (0) target = $region13
  $region12: #{dino_head4_forward.2} parent=0 // pred_region
    _
  $region13: #{dino_head4_forward.2} parent=0 // pred_fallthru
    _
  // Predicated region
  $region14: #{dino_head4_forward.2} parent=0 // pred_check
    _
  $region15: #{dino_head4_forward.2} parent=0 // pred_check_branch
    %21 = sbr.rel (0) target = $region17
  $region16: #{dino_head4_forward.2} parent=0 // pred_region
    _
  $region17: #{dino_head4_forward.2} parent=0 // pred_fallthru
    _
  // Predicated region
  $region18: #{dino_head4_forward.2} parent=0 // pred_check
    _
  $region19: #{dino_head4_forward.2} parent=0 // pred_check_branch
    %23 = sbr.rel (0) target = $region21
  $region20: #{dino_head4_forward.2} parent=0 // pred_region
    _
  $region21: #{dino_head4_forward.2} parent=0 // pred_fallthru
    _
  // Predicated region
  $region22: #{dino_head4_forward.2} parent=0 // pred_check
    _
  $region23: #{dino_head4_forward.2} parent=0 // pred_check_branch
    %25 = sbr.rel (0) target = $region25
  $region24: #{dino_head4_forward.2} parent=0 // pred_region
    _
  $region25: #{dino_head4_forward.2} parent=0 // pred_fallthru
    _
  // Predicated region
  $region26: #{dino_head4_forward.2} parent=0 // pred_check
    _
  $region27: #{dino_head4_forward.2} parent=0 // pred_check_branch
    %27 = sbr.rel (0) target = $region29
  $region28: #{dino_head4_forward.2} parent=0 // pred_region
    _
  $region29: #{dino_head4_forward.2} parent=0 // pred_fallthru
    _
  %v28 = vld [vmem:[%s0] sm:$0xff]
  %v29 = vld [vmem:[%s0 + $0x8] sm:$0xff]
  %v30 = vpack.c.bf16 %v29, %v28
  %v31 = vld [vmem:[%s1] sm:$0xf]
  %v32 = vld [vmem:[%s1 + $0x4] sm:$0xf]
  %v33 = vld [vmem:[%s1 + $0x8] sm:$0xf]
  %v34 = vld [vmem:[%s1 + $0xc] sm:$0xf]
  %v35 = vld [vmem:[%s1 + $0x10] sm:$0xf]
  %v36 = vld [vmem:[%s1 + $0x14] sm:$0xf]
  %v37 = vld [vmem:[%s1 + $0x18] sm:$0xf]
  %v38 = vld [vmem:[%s1 + $0x1c] sm:$0xf]
  %v39 = vld [vmem:[%s1 + $0x20] sm:$0xf]
  %v40 = vld [vmem:[%s1 + $0x24] sm:$0xf]
  %v41 = vld [vmem:[%s1 + $0x28] sm:$0xf]
  %v42 = vld [vmem:[%s1 + $0x2c] sm:$0xf]
  %v43 = vld [vmem:[%s1 + $0x30] sm:$0xf]
  %v44 = vld [vmem:[%s1 + $0x34] sm:$0xf]
  %v45 = vld [vmem:[%s1 + $0x38] sm:$0xf]
  %v46 = vld [vmem:[%s1 + $0x3c] sm:$0xf]
  %v47 = vld [vmem:[%s2] sm:$0x1]
  %v49 = vperm.slane %v47, 0
  %v67 = vunpack.c.l.b16 %v31
  %v68 = vunpack.c.l.b16 %v32
  %v69 = vunpack.c.l.b16 %v33
  %v70 = vunpack.c.l.b16 %v34
  %v71 = vunpack.c.l.b16 %v35
  %v72 = vunpack.c.l.b16 %v36
  %v73 = vunpack.c.l.b16 %v37
  %v74 = vunpack.c.l.b16 %v38
  %v75 = vunpack.c.l.b16 %v39
  %v76 = vunpack.c.l.b16 %v40
  %v77 = vunpack.c.l.b16 %v41
  %v78 = vunpack.c.l.b16 %v42
  %v79 = vunpack.c.l.b16 %v43
  %v80 = vunpack.c.l.b16 %v44
  %v81 = vunpack.c.l.b16 %v45
  %v82 = vunpack.c.l.b16 %v46
  %v83 = vpack.c.b16 %v68, %v67
  %v84 = vpack.c.b16 %v70, %v69
  %v85 = vpack.c.b16 %v72, %v71
  %v86 = vpack.c.b16 %v74, %v73
  %v87 = vpack.c.b16 %v76, %v75
  %v88 = vpack.c.b16 %v78, %v77
  %v89 = vpack.c.b16 %v80, %v79
  %v90 = vpack.c.b16 %v82, %v81
  %99 = vmatpush.bf16.msra.mxu0 %v90
  %100 = vmatpush.bf16.msra.mxu0 %v89
  %101 = vmatpush.bf16.msra.mxu0 %v88
  %102 = vmatpush.bf16.msra.mxu0 %v87
  %103 = vmatpush.bf16.msra.mxu0 %v86
  %104 = vmatpush.bf16.msra.mxu0 %v85
  %105 = vmatpush.bf16.msra.mxu0 %v84
  %106 = vmatpush.bf16.msra.mxu0 %v83
  %107 = vmatmul.bf16.gmra.mxu0 %v30
  %v108 = vpop.f32.mrf.mxu0
  %v109 = vadd.f32 %v49, %v108
  %v110 = vpop.f32.mrf.mxu0
  %v111 = vadd.f32 %v49, %v110
  %112 = vdwg.mxu0
  %v113 = vmul.f32 %v109, 0.5
  %v114 = vmul.f32 %v111, 0.5
  %v115 = vmul.f32 %v109, 0.70710677
  %v116 = vmul.f32 %v111, 0.70710677
  %v117 = vmul.f32 %v115, %v115
  %v118 = vmin.f32 16.0, %v117
  %v119 = vmul.f32 %v118, 2.1237322e-06
  %v120 = vadd.f32 %v119, 0.00028619796
  %v121 = vmul.f32 %v118, %v120
  %v122 = vadd.f32 %v121, 0.0036580483
  %v123 = vmul.f32 %v118, %v122
  %v124 = vadd.f32 %v123, 0.05243302
  %v125 = vmul.f32 %v118, %v124
  %v126 = vadd.f32 %v125, 0.18741608
  %v127 = vmul.f32 %v118, %v126
  %v128 = vadd.f32 %v127, 1.1283791
  %v129 = vmul.f32 %v115, %v128
  %v130 = vmul.f32 %v118, 3.8918573e-05
  %v131 = vadd.f32 %v130, 0.001143296
  %v132 = vmul.f32 %v118, %v131
  %v133 = vadd.f32 %v132, 0.014752088
  %v134 = vmul.f32 %v118, %v133
  %v135 = vadd.f32 %v134, 0.112945676
  %v136 = vmul.f32 %v118, %v135
  %v137 = vadd.f32 %v136, 0.4994258
  %v138 = vmul.f32 %v118, %v137
  %v139 = vadd.f32 %v138, 1.0
  %v140 = vrcp.pop %v139
  %v141 = vmul.f32 %v139, %v140
  %v142 = vsub.f32 1.0, %v141
  %v143 = vmul.f32 %v140, %v142
  %v144 = vadd.f32 %v140, %v143
  %vm145 = vweird.f32 %v139
  %vm146 = vweird.f32 %v140
  %vm147 = vmor %vm145, %vm146
  %v148 = vsel %vm147, %v140, %v144
  %v149 = vand.u32 2147483647, %v139
  %vm150 = vcmp.eq.f32.partialorder %v149, 8.507059e+37
  %v151 = vand.u32 %v139, 2147483648
  %v152 = vor.u32 1.1754944e-38, %v151
  %v153 = vsel %vm150, %v152, %v148
  %v154 = vmul.f32 %v129, %v153
  %v155 = vmin.f32 %v154, 1.0
  %v156 = vmax.f32 %v155, -1.0
  %v157 = vmul.f32 %v116, %v116
  %v158 = vmin.f32 16.0, %v157
  %v159 = vmul.f32 %v158, 2.1237322e-06
  %v160 = vadd.f32 %v159, 0.00028619796
  %v161 = vmul.f32 %v158, %v160
  %v162 = vadd.f32 %v161, 0.0036580483
  %v163 = vmul.f32 %v158, %v162
  %v164 = vadd.f32 %v163, 0.05243302
  %v165 = vmul.f32 %v158, %v164
  %v166 = vadd.f32 %v165, 0.18741608
  %v167 = vmul.f32 %v158, %v166
  %v168 = vadd.f32 %v167, 1.1283791
  %v169 = vmul.f32 %v116, %v168
  %v170 = vmul.f32 %v158, 3.8918573e-05
  %v171 = vadd.f32 %v170, 0.001143296
  %v172 = vmul.f32 %v158, %v171
  %v173 = vadd.f32 %v172, 0.014752088
  %v174 = vmul.f32 %v158, %v173
  %v175 = vadd.f32 %v174, 0.112945676
  %v176 = vmul.f32 %v158, %v175
  %v177 = vadd.f32 %v176, 0.4994258
  %v178 = vmul.f32 %v158, %v177
  %v179 = vadd.f32 %v178, 1.0
  %v180 = vrcp.pop %v179
  %v181 = vmul.f32 %v179, %v180
  %v182 = vsub.f32 1.0, %v181
  %v183 = vmul.f32 %v180, %v182
  %v184 = vadd.f32 %v180, %v183
  %vm185 = vweird.f32 %v179
  %vm186 = vweird.f32 %v180
  %vm187 = vmor %vm185, %vm186
  %v188 = vsel %vm187, %v180, %v184
  %v189 = vand.u32 2147483647, %v179
  %vm190 = vcmp.eq.f32.partialorder %v189, 8.507059e+37
  %v191 = vand.u32 %v179, 2147483648
  %v192 = vor.u32 1.1754944e-38, %v191
  %v193 = vsel %vm190, %v192, %v188
  %v194 = vmul.f32 %v169, %v193
  %v195 = vmin.f32 %v194, 1.0
  %v196 = vmax.f32 %v195, -1.0
  %v197 = vadd.f32 %v156, 1.0
  %v198 = vadd.f32 %v196, 1.0
  %v199 = vmul.f32 %v113, %v197
  %v200 = vmul.f32 %v114, %v198
  %v201 = vpack.c.bf16 %v200, %v199
  %v202 = vld [vmem:[%s3] sm:$0xf]
  %v203 = vld [vmem:[%s3 + $0x4] sm:$0xf]
  %v204 = vld [vmem:[%s3 + $0x8] sm:$0xf]
  %v205 = vld [vmem:[%s3 + $0xc] sm:$0xf]
  %v206 = vld [vmem:[%s3 + $0x10] sm:$0xf]
  %v207 = vld [vmem:[%s3 + $0x14] sm:$0xf]
  %v208 = vld [vmem:[%s3 + $0x18] sm:$0xf]
  %v209 = vld [vmem:[%s3 + $0x1c] sm:$0xf]
  %v210 = vld [vmem:[%s3 + $0x20] sm:$0xf]
  %v211 = vld [vmem:[%s3 + $0x24] sm:$0xf]
  %v212 = vld [vmem:[%s3 + $0x28] sm:$0xf]
  %v213 = vld [vmem:[%s3 + $0x2c] sm:$0xf]
  %v214 = vld [vmem:[%s3 + $0x30] sm:$0xf]
  %v215 = vld [vmem:[%s3 + $0x34] sm:$0xf]
  %v216 = vld [vmem:[%s3 + $0x38] sm:$0xf]
  %v217 = vld [vmem:[%s3 + $0x3c] sm:$0xf]
  %v218 = vld [vmem:[%s4] sm:$0x1]
  %v220 = vperm.slane %v218, 0
  %v238 = vunpack.c.l.b16 %v202
  %v239 = vunpack.c.l.b16 %v203
  %v240 = vunpack.c.l.b16 %v204
  %v241 = vunpack.c.l.b16 %v205
  %v242 = vunpack.c.l.b16 %v206
  %v243 = vunpack.c.l.b16 %v207
  %v244 = vunpack.c.l.b16 %v208
  %v245 = vunpack.c.l.b16 %v209
  %v246 = vunpack.c.l.b16 %v210
  %v247 = vunpack.c.l.b16 %v211
  %v248 = vunpack.c.l.b16 %v212
  %v249 = vunpack.c.l.b16 %v213
  %v250 = vunpack.c.l.b16 %v214
  %v251 = vunpack.c.l.b16 %v215
  %v252 = vunpack.c.l.b16 %v216
  %v253 = vunpack.c.l.b16 %v217
  %v254 = vpack.c.b16 %v239, %v238
  %v255 = vpack.c.b16 %v241, %v240
  %v256 = vpack.c.b16 %v243, %v242
  %v257 = vpack.c.b16 %v245, %v244
  %v258 = vpack.c.b16 %v247, %v246
  %v259 = vpack.c.b16 %v249, %v248
  %v260 = vpack.c.b16 %v251, %v250
  %v261 = vpack.c.b16 %v253, %v252
  %270 = vmatpush.bf16.msra.mxu0 %v261
  %271 = vmatpush.bf16.msra.mxu0 %v260
  %272 = vmatpush.bf16.msra.mxu0 %v259
  %273 = vmatpush.bf16.msra.mxu0 %v258
  %274 = vmatpush.bf16.msra.mxu0 %v257
  %275 = vmatpush.bf16.msra.mxu0 %v256
  %276 = vmatpush.bf16.msra.mxu0 %v255
  %277 = vmatpush.bf16.msra.mxu0 %v254
  %278 = vmatmul.bf16.gmra.mxu0 %v201
  %v279 = vpop.f32.mrf.mxu0
  %v280 = vadd.f32 %v220, %v279
  %v281 = vpop.f32.mrf.mxu0
  %v282 = vadd.f32 %v220, %v281
  %283 = vdwg.mxu0
  %v284 = vmul.f32 %v280, 0.5
  %v285 = vmul.f32 %v282, 0.5
  %v286 = vmul.f32 %v280, 0.70710677
  %v287 = vmul.f32 %v282, 0.70710677
  %v288 = vmul.f32 %v286, %v286
  %v289 = vmin.f32 16.0, %v288
  %v290 = vmul.f32 %v289, 2.1237322e-06
  %v291 = vadd.f32 %v290, 0.00028619796
  %v292 = vmul.f32 %v289, %v291
  %v293 = vadd.f32 %v292, 0.0036580483
  %v294 = vmul.f32 %v289, %v293
  %v295 = vadd.f32 %v294, 0.05243302
  %v296 = vmul.f32 %v289, %v295
  %v297 = vadd.f32 %v296, 0.18741608
  %v298 = vmul.f32 %v289, %v297
  %v299 = vadd.f32 %v298, 1.1283791
  %v300 = vmul.f32 %v286, %v299
  %v301 = vmul.f32 %v289, 3.8918573e-05
  %v302 = vadd.f32 %v301, 0.001143296
  %v303 = vmul.f32 %v289, %v302
  %v304 = vadd.f32 %v303, 0.014752088
  %v305 = vmul.f32 %v289, %v304
  %v306 = vadd.f32 %v305, 0.112945676
  %v307 = vmul.f32 %v289, %v306
  %v308 = vadd.f32 %v307, 0.4994258
  %v309 = vmul.f32 %v289, %v308
  %v310 = vadd.f32 %v309, 1.0
  %v311 = vrcp.pop %v310
  %v312 = vmul.f32 %v310, %v311
  %v313 = vsub.f32 1.0, %v312
  %v314 = vmul.f32 %v311, %v313
  %v315 = vadd.f32 %v311, %v314
  %vm316 = vweird.f32 %v310
  %vm317 = vweird.f32 %v311
  %vm318 = vmor %vm316, %vm317
  %v319 = vsel %vm318, %v311, %v315
  %v320 = vand.u32 2147483647, %v310
  %vm321 = vcmp.eq.f32.partialorder %v320, 8.507059e+37
  %v322 = vand.u32 %v310, 2147483648
  %v323 = vor.u32 1.1754944e-38, %v322
  %v324 = vsel %vm321, %v323, %v319
  %v325 = vmul.f32 %v300, %v324
  %v326 = vmin.f32 %v325, 1.0
  %v327 = vmax.f32 %v326, -1.0
  %v328 = vmul.f32 %v287, %v287
  %v329 = vmin.f32 16.0, %v328
  %v330 = vmul.f32 %v329, 2.1237322e-06
  %v331 = vadd.f32 %v330, 0.00028619796
  %v332 = vmul.f32 %v329, %v331
  %v333 = vadd.f32 %v332, 0.0036580483
  %v334 = vmul.f32 %v329, %v333
  %v335 = vadd.f32 %v334, 0.05243302
  %v336 = vmul.f32 %v329, %v335
  %v337 = vadd.f32 %v336, 0.18741608
  %v338 = vmul.f32 %v329, %v337
  %v339 = vadd.f32 %v338, 1.1283791
  %v340 = vmul.f32 %v287, %v339
  %v341 = vmul.f32 %v329, 3.8918573e-05
  %v342 = vadd.f32 %v341, 0.001143296
  %v343 = vmul.f32 %v329, %v342
  %v344 = vadd.f32 %v343, 0.014752088
  %v345 = vmul.f32 %v329, %v344
  %v346 = vadd.f32 %v345, 0.112945676
  %v347 = vmul.f32 %v329, %v346
  %v348 = vadd.f32 %v347, 0.4994258
  %v349 = vmul.f32 %v329, %v348
  %v350 = vadd.f32 %v349, 1.0
  %v351 = vrcp.pop %v350
  %v352 = vmul.f32 %v350, %v351
  %v353 = vsub.f32 1.0, %v352
  %v354 = vmul.f32 %v351, %v353
  %v355 = vadd.f32 %v351, %v354
  %vm356 = vweird.f32 %v350
  %vm357 = vweird.f32 %v351
  %vm358 = vmor %vm356, %vm357
  %v359 = vsel %vm358, %v351, %v355
  %v360 = vand.u32 2147483647, %v350
  %vm361 = vcmp.eq.f32.partialorder %v360, 8.507059e+37
  %v362 = vand.u32 %v350, 2147483648
  %v363 = vor.u32 1.1754944e-38, %v362
  %v364 = vsel %vm361, %v363, %v359
  %v365 = vmul.f32 %v340, %v364
  %v366 = vmin.f32 %v365, 1.0
  %v367 = vmax.f32 %v366, -1.0
  %v368 = vadd.f32 %v327, 1.0
  %v369 = vadd.f32 %v367, 1.0
  %v370 = vmul.f32 %v284, %v368
  %v371 = vmul.f32 %v285, %v369
  %v372 = vpack.c.bf16 %v371, %v370
  %v373 = vld [vmem:[%s5] sm:$0xf]
  %v374 = vld [vmem:[%s5 + $0x4] sm:$0xf]
  %v375 = vld [vmem:[%s5 + $0x8] sm:$0xf]
  %v376 = vld [vmem:[%s5 + $0xc] sm:$0xf]
  %v377 = vld [vmem:[%s5 + $0x10] sm:$0xf]
  %v378 = vld [vmem:[%s5 + $0x14] sm:$0xf]
  %v379 = vld [vmem:[%s5 + $0x18] sm:$0xf]
  %v380 = vld [vmem:[%s5 + $0x1c] sm:$0xf]
  %v381 = vld [vmem:[%s5 + $0x20] sm:$0xf]
  %v382 = vld [vmem:[%s5 + $0x24] sm:$0xf]
  %v383 = vld [vmem:[%s5 + $0x28] sm:$0xf]
  %v384 = vld [vmem:[%s5 + $0x2c] sm:$0xf]
  %v385 = vld [vmem:[%s5 + $0x30] sm:$0xf]
  %v386 = vld [vmem:[%s5 + $0x34] sm:$0xf]
  %v387 = vld [vmem:[%s5 + $0x38] sm:$0xf]
  %v388 = vld [vmem:[%s5 + $0x3c] sm:$0xf]
  %v389 = vld [vmem:[%s6] sm:$0x1]
  %v391 = vperm.slane %v389, 0
  %v409 = vunpack.c.l.b16 %v373
  %v410 = vunpack.c.l.b16 %v374
  %v411 = vunpack.c.l.b16 %v375
  %v412 = vunpack.c.l.b16 %v376
  %v413 = vunpack.c.l.b16 %v377
  %v414 = vunpack.c.l.b16 %v378
  %v415 = vunpack.c.l.b16 %v379
  %v416 = vunpack.c.l.b16 %v380
  %v417 = vunpack.c.l.b16 %v381
  %v418 = vunpack.c.l.b16 %v382
  %v419 = vunpack.c.l.b16 %v383
  %v420 = vunpack.c.l.b16 %v384
  %v421 = vunpack.c.l.b16 %v385
  %v422 = vunpack.c.l.b16 %v386
  %v423 = vunpack.c.l.b16 %v387
  %v424 = vunpack.c.l.b16 %v388
  %v425 = vpack.c.b16 %v410, %v409
  %v426 = vpack.c.b16 %v412, %v411
  %v427 = vpack.c.b16 %v414, %v413
  %v428 = vpack.c.b16 %v416, %v415
  %v429 = vpack.c.b16 %v418, %v417
  %v430 = vpack.c.b16 %v420, %v419
  %v431 = vpack.c.b16 %v422, %v421
  %v432 = vpack.c.b16 %v424, %v423
  %441 = vmatpush.bf16.msra.mxu0 %v432
  %442 = vmatpush.bf16.msra.mxu0 %v431
  %443 = vmatpush.bf16.msra.mxu0 %v430
  %444 = vmatpush.bf16.msra.mxu0 %v429
  %445 = vmatpush.bf16.msra.mxu0 %v428
  %446 = vmatpush.bf16.msra.mxu0 %v427
  %447 = vmatpush.bf16.msra.mxu0 %v426
  %448 = vmatpush.bf16.msra.mxu0 %v425
  %449 = vmatmul.bf16.gmra.mxu0 %v372
  %v450 = vpop.f32.mrf.mxu0
  %v451 = vadd.f32 %v391, %v450
  %v452 = vpop.f32.mrf.mxu0
  %v453 = vadd.f32 %v391, %v452
  %454 = vdwg.mxu0
  %455 = vst [vmem:[%s7] sm:$0xff] %v451
  %456 = vst [vmem:[%s7 + $0x8] sm:$0xff] %v453
  %v457 = vmul.f32 %v28, %v28
  %v458 = vmul.f32 %v29, %v29
  %459 = vadd.xlane.f32.xlu0 %v457
  %v460 = vpop.xlane.xlu0 %459
  %461 = vadd.xlane.f32.xlu0 %v458
  %v462 = vpop.xlane.xlu0 %461
  %v463 = vmax.f32 %v460, 1e-24
  %v464 = vmax.f32 %v462, 1e-24
  %v465 = vrsqrt.pop %v463
  %v466 = vmul.f32 %v465, %v463
  %v467 = vmul.f32 %v466, %v465
  %v468 = vmul.f32 0.5, %v467
  %v469 = vsub.f32 1.5, %v468
  %v470 = vmul.f32 %v465, %v469
  %vm471 = vweird.f32 %v463
  %vm472 = vweird.f32 %v465
  %vm473 = vmor %vm471, %vm472
  %v474 = vsel %vm473, %v465, %v470
  %v475 = vrsqrt.pop %v464
  %v476 = vmul.f32 %v475, %v464
  %v477 = vmul.f32 %v476, %v475
  %v478 = vmul.f32 0.5, %v477
  %v479 = vsub.f32 1.5, %v478
  %v480 = vmul.f32 %v475, %v479
  %vm481 = vweird.f32 %v464
  %vm482 = vweird.f32 %v475
  %vm483 = vmor %vm481, %vm482
  %v484 = vsel %vm483, %v475, %v480
  %v485 = vmul.f32 %v28, %v474
  %v486 = vmul.f32 %v29, %v484
  %v487 = vpack.c.bf16 %v485, %v485
  %v488 = vpack.c.bf16 %v486, %v486
  %489 = vst [vmem:[%s8] sm:$0xf] %v487
  %490 = vst [vmem:[%s8 + $0x4] sm:$0xf] %v488
  // Predicated region
  $region30: #{dino_head4_forward.2} parent=0 // pred_check
    _
  $region31: #{dino_head4_forward.2} parent=0 // pred_check_branch
    %492 = sbr.rel (0) target = $region33
  $region32: #{dino_head4_forward.2} parent=0 // pred_region
    _
  $region33: #{dino_head4_forward.2} parent=0 // pred_fallthru
    _
  // Predicated region
  $region34: #{dino_head4_forward.2} parent=0 // pred_check
    _
  $region35: #{dino_head4_forward.2} parent=0 // pred_check_branch
    %494 = sbr.rel (0) target = $region37
  $region36: #{dino_head4_forward.2} parent=0 // pred_region
    _
  $region37: #{dino_head4_forward.2} parent=0 // pred_fallthru
    _
  // Predicated region
  $region38: #{dino_head4_forward.2} parent=0 // pred_check
    _
  $region39: #{dino_head4_forward.2} parent=0 // pred_check_branch
    %496 = sbr.rel (0) target = $region41
  $region40: #{dino_head4_forward.2} parent=0 // pred_region
    _
  $region41: #{dino_head4_forward.2} parent=0 // pred_fallthru
    _
  // Predicated region
  $region42: #{dino_head4_forward.2} parent=0 // pred_check
    _
  $region43: #{dino_head4_forward.2} parent=0 // pred_check_branch
    %498 = sbr.rel (0) target = $region45
  $region44: #{dino_head4_forward.2} parent=0 // pred_region
    _
  $region45: #{dino_head4_forward.2} parent=0 // pred_fallthru
    _

</llo_original>
